<compile_context>
chip_gen: v6e
topology: v6e:2x2x1
jax: 0.10.0
libtpu: 0.0.40
codegen_flags: <defaults>
</compile_context>

<pallas_src>
import functools

import jax
import jax.numpy as jnp
from jax.experimental import pallas as pl
from jax.experimental.pallas import tpu as pltpu


def _round_up(x, m):
    return ((x + m - 1) // m) * m


def _mlp_kernel(n_layers, x_ref, *refs):
    """refs = (W0, b0, W1, b1, ..., Wout, bout, out_ref).

    n_layers hidden layers (Linear -> Tanh), final Linear with identity.
    Weights are bf16 MXU operands; accumulation / bias / tanh are f32.
    """
    out_ref = refs[-1]
    param_refs = refs[:-1]  # 2 * (n_layers + 1) refs

    h = x_ref[...].astype(jnp.bfloat16)
    for layer in range(n_layers):
        w_ref = param_refs[2 * layer]
        b_ref = param_refs[2 * layer + 1]
        acc = jnp.dot(h, w_ref[...], preferred_element_type=jnp.float32)
        acc = acc + b_ref[...]            # f32 bias add
        h = jnp.tanh(acc).astype(jnp.bfloat16)   # f32 tanh (EUP), bf16 for next dot
    w_ref = param_refs[2 * n_layers]
    b_ref = param_refs[2 * n_layers + 1]
    y = jnp.dot(h, w_ref[...], preferred_element_type=jnp.float32) + b_ref[...]
    out_ref[...] = y.astype(out_ref.dtype)


def mlp_policy_forward(observation, params, tile_b=256):
    """Pallas forward pass of MLPPolicy.mean_net.

    observation: (B, ob_dim) float32
    params: list of (W, b), W shape (in, out) f32, b shape (1, out) f32;
            len(params) == n_layers + 1. (W = torch_linear.weight.T)
    Returns: (B, ac_dim) float32 action means.
    """
    n_layers = len(params) - 1
    B, ob_dim = observation.shape
    ac_dim = params[-1][0].shape[1]

    # --- parameter prep: bf16 weights, f32 biases, lane-dense last layer ---
    out_pad = _round_up(max(ac_dim, 128), 128)
    prepared = []
    for li, (w, b) in enumerate(params):
        if li == n_layers:  # output layer -> pad out-dim to 128 lanes (zeros)
            w = jnp.pad(w, ((0, 0), (0, out_pad - ac_dim)))
            b = jnp.pad(b, ((0, 0), (0, out_pad - ac_dim)))
        prepared.append((w.astype(jnp.bfloat16), b.astype(jnp.float32)))

    # --- batch tiling: pad B to a multiple of tile_b (multiple of 8) ---
    tile_b = max(8, min(tile_b, _round_up(B, 8)))
    tile_b = _round_up(tile_b, 8)
    B_pad = _round_up(B, tile_b)
    if B_pad != B:
        observation = jnp.pad(observation, ((0, B_pad - B), (0, 0)))
    grid = (B_pad // tile_b,)

    # --- specs: obs/out tiled over batch, params resident across the grid ---
    in_specs = [pl.BlockSpec((tile_b, ob_dim), lambda i: (i, 0))]
    flat_params = []
    for w, b in prepared:
        in_specs.append(pl.BlockSpec(w.shape, lambda i: (0, 0)))
        in_specs.append(pl.BlockSpec(b.shape, lambda i: (0, 0)))
        flat_params.extend((w, b))
    out_specs = pl.BlockSpec((tile_b, out_pad), lambda i: (i, 0))

    # --- advisory cost estimate for XLA scheduling ---
    flops = 0
    bytes_accessed = observation.size * 4 + B_pad * out_pad * 4
    for w, b in prepared:
        flops += 2 * B_pad * w.shape[0] * w.shape[1]
        bytes_accessed += w.size * 2 + b.size * 4
    transcendentals = B_pad * sum(w.shape[1] for w, _ in prepared[:-1])

    kernel = functools.partial(_mlp_kernel, n_layers)
    out = pl.pallas_call(
        kernel,
        out_shape=jax.ShapeDtypeStruct((B_pad, out_pad), jnp.float32),
        grid=grid,
        in_specs=in_specs,
        out_specs=out_specs,
        compiler_params=pltpu.CompilerParams(
            dimension_semantics=("parallel",),  # shard batch over TCs on v7x
        ),
        cost_estimate=pl.CostEstimate(
            flops=flops,
            transcendentals=transcendentals,
            bytes_accessed=bytes_accessed,
        ),
    )(observation, *flat_params)

    return out[:B, :ac_dim]


def init_mlp_params(key, ob_dim, ac_dim, n_layers, size):
    """Deterministic init mimicking torch.nn.Linear default U[-1/sqrt(fan_in), +]."""
    dims = [ob_dim] + [size] * n_layers + [ac_dim]
    params = []
    for i in range(len(dims) - 1):
        fan_in, fan_out = dims[i], dims[i + 1]
        key, kw, kb = jax.random.split(key, 3)
        bound = 1.0 / jnp.sqrt(jnp.float32(fan_in))
        w = jax.random.uniform(kw, (fan_in, fan_out), jnp.float32, -bound, bound)
        b = jax.random.uniform(kb, (1, fan_out), jnp.float32, -bound, bound)
        params.append((w, b))
    return params


def mlp_reference(observation, params):
    """Pure-JAX f32 reference of mean_net for correctness check."""
    h = observation
    for w, b in params[:-1]:
        h = jnp.tanh(h @ w + b)
    w, b = params[-1]
    return h @ w + b


if __name__ == "__main__":
    # Small shapes consistent with the module's constructor arguments.
    B = 20         # batch of observations (not a multiple of tile -> tests padding)
    ob_dim = 16
    ac_dim = 4
    n_layers = 2
    size = 32

    key = jax.random.PRNGKey(0)
    key, kobs = jax.random.split(key)
    observation = jax.random.normal(kobs, (B, ob_dim), jnp.float32)

    params = init_mlp_params(key, ob_dim, ac_dim, n_layers, size)
    # logstd parameter from __init__ (unused in forward, continuous branch).
    logstd = jnp.zeros((ac_dim,), jnp.float32)  # noqa: F841

    # tile_b=8 exercises a multi-step batch grid even at this toy batch size;
    # production callers should batch hundreds/thousands of obs and use the
    # default tile_b=256 for real throughput.
    out = mlp_policy_forward(observation, params, tile_b=8)
    out = jax.block_until_ready(out)

    ref = mlp_reference(observation, params)
    assert out.shape == (B, ac_dim), out.shape
    # bf16 matmul operands (f32 accumulation) -> looser tolerance than pure f32.
    assert jnp.allclose(out, ref, atol=1e-2, rtol=1e-2), (
        "Pallas output mismatch vs reference: "
        f"max abs err {jnp.max(jnp.abs(out - ref))}"
    )
    # TODO(synk): the discrete branch wraps the same MLP output in a
    # torch.distributions.Categorical; distribution objects have no Pallas
    # equivalent, so only the logits/mean computation is implemented here.
    print("KERNEL_OK")
</pallas_src>

<mosaic_0001>
module attributes {stable_mosaic.version = 11 : i64} {
  func.func @_mlp_kernel(%arg0: i32, %arg1: memref<8x16xf32, #tpu.memory_space<vmem>>, %arg2: memref<16x32xbf16, #tpu.memory_space<vmem>>, %arg3: memref<1x32xf32, #tpu.memory_space<vmem>>, %arg4: memref<32x32xbf16, #tpu.memory_space<vmem>>, %arg5: memref<1x32xf32, #tpu.memory_space<vmem>>, %arg6: memref<32x128xbf16, #tpu.memory_space<vmem>>, %arg7: memref<1x128xf32, #tpu.memory_space<vmem>>, %arg8: memref<8x128xf32, #tpu.memory_space<vmem>>) attributes {dimension_semantics = [#tpu.dimension_semantics<parallel>], iteration_bounds = array<i64: 3>, scalar_prefetch = 0 : i64, scratch_operands = 0 : i64, tpu.core_type = #tpu.core_type<tc>, window_params = [{transform_indices = @transform_0, window_bounds = array<i64: 8, 16>}, {pipeline_mode = #tpu.pipeline_mode<synchronous>, transform_indices = @transform_1, window_bounds = array<i64: 16, 32>}, {pipeline_mode = #tpu.pipeline_mode<synchronous>, transform_indices = @transform_2, window_bounds = array<i64: 1, 32>}, {pipeline_mode = #tpu.pipeline_mode<synchronous>, transform_indices = @transform_3, window_bounds = array<i64: 32, 32>}, {pipeline_mode = #tpu.pipeline_mode<synchronous>, transform_indices = @transform_4, window_bounds = array<i64: 1, 32>}, {pipeline_mode = #tpu.pipeline_mode<synchronous>, transform_indices = @transform_5, window_bounds = array<i64: 32, 128>}, {pipeline_mode = #tpu.pipeline_mode<synchronous>, transform_indices = @transform_6, window_bounds = array<i64: 1, 128>}, {transform_indices = @transform_7, window_bounds = array<i64: 8, 128>}]} {
    %c0 = arith.constant 0 : index
    %c0_0 = arith.constant 0 : index
    %0 = vector.load %arg1[%c0, %c0_0] : memref<8x16xf32, #tpu.memory_space<vmem>>, vector<8x16xf32>
    %1 = arith.truncf %0 : vector<8x16xf32> to vector<8x16xbf16>
    %c0_1 = arith.constant 0 : index
    %c0_2 = arith.constant 0 : index
    %2 = vector.load %arg2[%c0_1, %c0_2] : memref<16x32xbf16, #tpu.memory_space<vmem>>, vector<16x32xbf16>
    %cst = arith.constant dense<0.000000e+00> : vector<8x32xf32>
    %3 = tpu.matmul %1, %2, %cst {dimension_numbers = #tpu.dot_dimension_numbers<[1], [0], [0], [1], [0, 0, 1, 1], [], []>} : vector<8x16xbf16>, vector<16x32xbf16>, vector<8x32xf32> -> vector<8x32xf32>
    %c0_3 = arith.constant 0 : index
    %c0_4 = arith.constant 0 : index
    %4 = vector.load %arg3[%c0_3, %c0_4] : memref<1x32xf32, #tpu.memory_space<vmem>>, vector<1x32xf32>
    %5 = vector.broadcast %4 : vector<1x32xf32> to vector<8x32xf32>
    %6 = arith.addf %3, %5 : vector<8x32xf32>
    %7 = math.tanh %6 : vector<8x32xf32>
    %8 = arith.truncf %7 : vector<8x32xf32> to vector<8x32xbf16>
    %c0_5 = arith.constant 0 : index
    %c0_6 = arith.constant 0 : index
    %9 = vector.load %arg4[%c0_5, %c0_6] : memref<32x32xbf16, #tpu.memory_space<vmem>>, vector<32x32xbf16>
    %cst_7 = arith.constant dense<0.000000e+00> : vector<8x32xf32>
    %10 = tpu.matmul %8, %9, %cst_7 {dimension_numbers = #tpu.dot_dimension_numbers<[1], [0], [0], [1], [0, 0, 1, 1], [], []>} : vector<8x32xbf16>, vector<32x32xbf16>, vector<8x32xf32> -> vector<8x32xf32>
    %c0_8 = arith.constant 0 : index
    %c0_9 = arith.constant 0 : index
    %11 = vector.load %arg5[%c0_8, %c0_9] : memref<1x32xf32, #tpu.memory_space<vmem>>, vector<1x32xf32>
    %12 = vector.broadcast %11 : vector<1x32xf32> to vector<8x32xf32>
    %13 = arith.addf %10, %12 : vector<8x32xf32>
    %14 = math.tanh %13 : vector<8x32xf32>
    %15 = arith.truncf %14 : vector<8x32xf32> to vector<8x32xbf16>
    %c0_10 = arith.constant 0 : index
    %c0_11 = arith.constant 0 : index
    %16 = vector.load %arg6[%c0_10, %c0_11] : memref<32x128xbf16, #tpu.memory_space<vmem>>, vector<32x128xbf16>
    %cst_12 = arith.constant dense<0.000000e+00> : vector<8x128xf32>
    %17 = tpu.matmul %15, %16, %cst_12 {dimension_numbers = #tpu.dot_dimension_numbers<[1], [0], [0], [1], [0, 0, 1, 1], [], []>} : vector<8x32xbf16>, vector<32x128xbf16>, vector<8x128xf32> -> vector<8x128xf32>
    %c0_13 = arith.constant 0 : index
    %c0_14 = arith.constant 0 : index
    %18 = vector.load %arg7[%c0_13, %c0_14] : memref<1x128xf32, #tpu.memory_space<vmem>>, vector<1x128xf32>
    %19 = vector.broadcast %18 : vector<1x128xf32> to vector<8x128xf32>
    %20 = arith.addf %17, %19 : vector<8x128xf32>
    %c0_15 = arith.constant 0 : index
    %c0_16 = arith.constant 0 : index
    %21 = vector.load %arg8[%c0_15, %c0_16] : memref<8x128xf32, #tpu.memory_space<vmem>>, vector<8x128xf32>
    tpu.vector_store %arg8[%c0_15, %c0_16], %20 {strides = array<i32>} : memref<8x128xf32, #tpu.memory_space<vmem>>, vector<8x128xf32>,
    return
  }
  func.func @transform_0(%arg0: i32) -> (i32, i32) {
    %c0_i32 = arith.constant 0 : i32
    %c0_i32_0 = arith.constant 0 : i32
    return %arg0, %c0_i32 : i32, i32
  }
  func.func @transform_1(%arg0: i32) -> (i32, i32) {
    %c0_i32 = arith.constant 0 : i32
    %c0_i32_0 = arith.constant 0 : i32
    %c0_i32_1 = arith.constant 0 : i32
    return %c0_i32, %c0_i32_0 : i32, i32
  }
  func.func @transform_2(%arg0: i32) -> (i32, i32) {
    %c0_i32 = arith.constant 0 : i32
    %c0_i32_0 = arith.constant 0 : i32
    %c0_i32_1 = arith.constant 0 : i32
    return %c0_i32, %c0_i32_0 : i32, i32
  }
  func.func @transform_3(%arg0: i32) -> (i32, i32) {
    %c0_i32 = arith.constant 0 : i32
    %c0_i32_0 = arith.constant 0 : i32
    %c0_i32_1 = arith.constant 0 : i32
    return %c0_i32, %c0_i32_0 : i32, i32
  }
  func.func @transform_4(%arg0: i32) -> (i32, i32) {
    %c0_i32 = arith.constant 0 : i32
    %c0_i32_0 = arith.constant 0 : i32
    %c0_i32_1 = arith.constant 0 : i32
    return %c0_i32, %c0_i32_0 : i32, i32
  }
  func.func @transform_5(%arg0: i32) -> (i32, i32) {
    %c0_i32 = arith.constant 0 : i32
    %c0_i32_0 = arith.constant 0 : i32
    %c0_i32_1 = arith.constant 0 : i32
    return %c0_i32, %c0_i32_0 : i32, i32
  }
  func.func @transform_6(%arg0: i32) -> (i32, i32) {
    %c0_i32 = arith.constant 0 : i32
    %c0_i32_0 = arith.constant 0 : i32
    %c0_i32_1 = arith.constant 0 : i32
    return %c0_i32, %c0_i32_0 : i32, i32
  }
  func.func @transform_7(%arg0: i32) -> (i32, i32) {
    %c0_i32 = arith.constant 0 : i32
    %c0_i32_0 = arith.constant 0 : i32
    return %arg0, %c0_i32 : i32, i32
  }
}

</mosaic_0001>

<llo_original>
// kernel: tpu_custom_call.1
$region0: #{tpu_custom_call.1}
  #allocation0 [shape = 'u32[]', space=smem, size = 0x4, offset = 0x4, fixed_abs, tag = 'smem constant byte address 0x4 - core index']
  #allocation1 [shape = 'u32[144,128]{1,0:T(1,128)}', space=vmem, size = 0x12000, scoped, tag = 'internal scratch']
  %s0 = inlined_call_operand.vmem [shape: f32[24,16], index: 0, kind: input, shape index: {}]
  %s1 = inlined_call_operand.vmem [shape: bf16[16,32], index: 1, kind: input, shape index: {}]
  %s2 = inlined_call_operand.vmem [shape: f32[1,32], index: 2, kind: input, shape index: {}]
  %s3 = inlined_call_operand.vmem [shape: bf16[32,32], index: 3, kind: input, shape index: {}]
  %s4 = inlined_call_operand.vmem [shape: f32[1,32], index: 4, kind: input, shape index: {}]
  %s5 = inlined_call_operand.vmem [shape: bf16[32,128], index: 5, kind: input, shape index: {}]
  %s6 = inlined_call_operand.vmem [shape: f32[1,128], index: 6, kind: input, shape index: {}]
  %s7 = inlined_call_operand.hbm [shape: f32[24,128], index: 7, kind: output, shape index: {}]
  %s8 = sld [smem:[#allocation0]]
  $region61: #{tpu_custom_call.1} parent=0
    _
  %s10 = ssub.s32 1, %s8
  %s11 = scalar_select 0, %s10, %s8
  $region1: #{tpu_custom_call.1} parent=0
    #allocation2 [shape = 'u8[8192]{0}', space=vmem, size = 0x2000, scoped, tag = 'output window, operand 0']
    #allocation3 [shape = 's32[2]{0}', space=sflag, size = 0x8, scoped, tag = 'scoped memory for tpu_custom_call.1']
    %12 = vsyncpa [#allocation3], 0
    %s13 = scalar_lea.sflag [#allocation3], 1
    %14 = vsyncpa %s13, 0
    loop: start=0, step=1, limit=5
    $region2: #{tpu_custom_call.1} parent=1 // loop_pre_header
      _
    $region3: #{tpu_custom_call.1} parent=1 // loop_header
      %s16 = sphi 0, %s20
      %p17 = scmp.ge.s32.totalorder %s16, 5
      %s26 = sphi 0, %s28
      %s29 = sphi 0, %s26
      %s30 = sphi 0, %s29
      %s46 = sphi 0, %s30
      %s50 = sphi 0, %s50
      %s52 = sphi 0, %s50
      %s53 = sphi 0, %s52
      %s67 = sphi 0, %s53
      %s71 = sphi 0, %s71
      %s73 = sphi 0, %s71
      %s74 = sphi 0, %s73
      %s88 = sphi 0, %s74
      %s92 = sphi 0, %s92
      %s94 = sphi 0, %s92
      %s95 = sphi 0, %s94
      %s109 = sphi 0, %s95
      %s113 = sphi 0, %s113
      %s115 = sphi 0, %s113
      %s116 = sphi 0, %s115
      %s130 = sphi 0, %s116
      %s134 = sphi 0, %s134
      %s136 = sphi 0, %s134
      %s137 = sphi 0, %s136
      %s151 = sphi 0, %s137
      %s155 = sphi 0, %s155
      %s157 = sphi 0, %s155
      %s158 = sphi 0, %s157
      %s172 = sphi 0, %s158
      %s178 = sphi 0, %s180
      %s181 = sphi 0, %s178
      %s182 = sphi 0, %s181
      %s198 = sphi 0, %s182
    $region4: #{tpu_custom_call.1} parent=1 // loop_header_branch
      %19 = sbr.rel (%p17) target = $region8
    $region5: #{tpu_custom_call.1} parent=1 // loop_body
      %s21 = ssub.s32 %s16, 1
      %s22 = ssub.s32 %s16, 2
      %s23 = sadd.s32 %s16, 1
      %s24 = ssub.s32 %s16, %s23
      %p25 = scmp.eq.s32.totalorder %s24, 0
      %s27 = sadd.s32 %s26, 1
      %s28 = scalar_select %p25, %s26, %s27
      %p31 = pneg %p25
      %p32 = scmp.eq.s32.totalorder %s16, 2
      %p33 = por %p31, %p32
      %p34 = scmp.ne.s32.totalorder %s26, %s29
      %p35 = scmp.eq.s32.totalorder %s16, 0
      %p36 = por %p34, %p35
      %p37 = scmp.ne.s32.totalorder %s26, %s29
      %p38 = scmp.eq.s32.totalorder %s21, 2
      %p39 = por %p37, %p38
      %p40 = scmp.ne.s32.totalorder %s29, %s30
      %p41 = scmp.eq.s32.totalorder %s21, 0
      %p42 = por %p40, %p41
      %p43 = scmp.ne.s32.totalorder %s29, %s30
      %p44 = scmp.eq.s32.totalorder %s22, 2
      %p45 = por %p43, %p44
      %p47 = scmp.ne.s32.totalorder %s30, %s46
      %p48 = scmp.eq.s32.totalorder %s22, 0
      %p49 = por %p47, %p48
      %s51 = sadd.s32 %s50, 1
      %p54 = scmp.eq.s32.totalorder %s16, 2
      %p55 = scmp.ne.s32.totalorder %s50, %s52
      %p56 = scmp.eq.s32.totalorder %s16, 0
      %p57 = por %p55, %p56
      %p58 = scmp.ne.s32.totalorder %s50, %s52
      %p59 = scmp.eq.s32.totalorder %s21, 2
      %p60 = por %p58, %p59
      %p61 = scmp.ne.s32.totalorder %s52, %s53
      %p62 = scmp.eq.s32.totalorder %s21, 0
      %p63 = por %p61, %p62
      %p64 = scmp.ne.s32.totalorder %s52, %s53
      %p65 = scmp.eq.s32.totalorder %s22, 2
      %p66 = por %p64, %p65
      %p68 = scmp.ne.s32.totalorder %s53, %s67
      %p69 = scmp.eq.s32.totalorder %s22, 0
      %p70 = por %p68, %p69
      %s72 = sadd.s32 %s71, 1
      %p75 = scmp.eq.s32.totalorder %s16, 2
      %p76 = scmp.ne.s32.totalorder %s71, %s73
      %p77 = scmp.eq.s32.totalorder %s16, 0
      %p78 = por %p76, %p77
      %p79 = scmp.ne.s32.totalorder %s71, %s73
      %p80 = scmp.eq.s32.totalorder %s21, 2
      %p81 = por %p79, %p80
      %p82 = scmp.ne.s32.totalorder %s73, %s74
      %p83 = scmp.eq.s32.totalorder %s21, 0
      %p84 = por %p82, %p83
      %p85 = scmp.ne.s32.totalorder %s73, %s74
      %p86 = scmp.eq.s32.totalorder %s22, 2
      %p87 = por %p85, %p86
      %p89 = scmp.ne.s32.totalorder %s74, %s88
      %p90 = scmp.eq.s32.totalorder %s22, 0
      %p91 = por %p89, %p90
      %s93 = sadd.s32 %s92, 1
      %p96 = scmp.eq.s32.totalorder %s16, 2
      %p97 = scmp.ne.s32.totalorder %s92, %s94
      %p98 = scmp.eq.s32.totalorder %s16, 0
      %p99 = por %p97, %p98
      %p100 = scmp.ne.s32.totalorder %s92, %s94
      %p101 = scmp.eq.s32.totalorder %s21, 2
      %p102 = por %p100, %p101
      %p103 = scmp.ne.s32.totalorder %s94, %s95
      %p104 = scmp.eq.s32.totalorder %s21, 0
      %p105 = por %p103, %p104
      %p106 = scmp.ne.s32.totalorder %s94, %s95
      %p107 = scmp.eq.s32.totalorder %s22, 2
      %p108 = por %p106, %p107
      %p110 = scmp.ne.s32.totalorder %s95, %s109
      %p111 = scmp.eq.s32.totalorder %s22, 0
      %p112 = por %p110, %p111
      %s114 = sadd.s32 %s113, 1
      %p117 = scmp.eq.s32.totalorder %s16, 2
      %p118 = scmp.ne.s32.totalorder %s113, %s115
      %p119 = scmp.eq.s32.totalorder %s16, 0
      %p120 = por %p118, %p119
      %p121 = scmp.ne.s32.totalorder %s113, %s115
      %p122 = scmp.eq.s32.totalorder %s21, 2
      %p123 = por %p121, %p122
      %p124 = scmp.ne.s32.totalorder %s115, %s116
      %p125 = scmp.eq.s32.totalorder %s21, 0
      %p126 = por %p124, %p125
      %p127 = scmp.ne.s32.totalorder %s115, %s116
      %p128 = scmp.eq.s32.totalorder %s22, 2
      %p129 = por %p127, %p128
      %p131 = scmp.ne.s32.totalorder %s116, %s130
      %p132 = scmp.eq.s32.totalorder %s22, 0
      %p133 = por %p131, %p132
      %s135 = sadd.s32 %s134, 1
      %p138 = scmp.eq.s32.totalorder %s16, 2
      %p139 = scmp.ne.s32.totalorder %s134, %s136
      %p140 = scmp.eq.s32.totalorder %s16, 0
      %p141 = por %p139, %p140
      %p142 = scmp.ne.s32.totalorder %s134, %s136
      %p143 = scmp.eq.s32.totalorder %s21, 2
      %p144 = por %p142, %p143
      %p145 = scmp.ne.s32.totalorder %s136, %s137
      %p146 = scmp.eq.s32.totalorder %s21, 0
      %p147 = por %p145, %p146
      %p148 = scmp.ne.s32.totalorder %s136, %s137
      %p149 = scmp.eq.s32.totalorder %s22, 2
      %p150 = por %p148, %p149
      %p152 = scmp.ne.s32.totalorder %s137, %s151
      %p153 = scmp.eq.s32.totalorder %s22, 0
      %p154 = por %p152, %p153
      %s156 = sadd.s32 %s155, 1
      %p159 = scmp.eq.s32.totalorder %s16, 2
      %p160 = scmp.ne.s32.totalorder %s155, %s157
      %p161 = scmp.eq.s32.totalorder %s16, 0
      %p162 = por %p160, %p161
      %p163 = scmp.ne.s32.totalorder %s155, %s157
      %p164 = scmp.eq.s32.totalorder %s21, 2
      %p165 = por %p163, %p164
      %p166 = scmp.ne.s32.totalorder %s157, %s158
      %p167 = scmp.eq.s32.totalorder %s21, 0
      %p168 = por %p166, %p167
      %p169 = scmp.ne.s32.totalorder %s157, %s158
      %p170 = scmp.eq.s32.totalorder %s22, 2
      %p171 = por %p169, %p170
      %p173 = scmp.ne.s32.totalorder %s158, %s172
      %p174 = scmp.eq.s32.totalorder %s22, 0
      %p175 = por %p173, %p174
      %s176 = ssub.s32 %s16, %s23
      %p177 = scmp.eq.s32.totalorder %s176, 0
      %s179 = sadd.s32 %s178, 1
      %s180 = scalar_select %p177, %s178, %s179
      %p183 = pneg %p177
      %p184 = scmp.eq.s32.totalorder %s16, 2
      %p185 = por %p183, %p184
      %p186 = scmp.ne.s32.totalorder %s178, %s181
      %p187 = scmp.eq.s32.totalorder %s16, 0
      %p188 = por %p186, %p187
      %p189 = scmp.ne.s32.totalorder %s178, %s181
      %p190 = scmp.eq.s32.totalorder %s21, 2
      %p191 = por %p189, %p190
      %p192 = scmp.ne.s32.totalorder %s181, %s182
      %p193 = scmp.eq.s32.totalorder %s21, 0
      %p194 = por %p192, %p193
      %p195 = scmp.ne.s32.totalorder %s181, %s182
      %p196 = scmp.eq.s32.totalorder %s22, 2
      %p197 = por %p195, %p196
      %p199 = scmp.ne.s32.totalorder %s182, %s198
      %p200 = scmp.eq.s32.totalorder %s22, 0
      %p201 = por %p199, %p200
      %p202 = scmp.le.s32.totalorder 1, %s16
      %p203 = scmp.lt.s32.totalorder %s16, 4
      %p204 = pnand %p202, %p203
      %p205 = pneg %p204
      // Predicated region
      $region9: #{tpu_custom_call.1} parent=5 // pred_check
        _
      $region10: #{tpu_custom_call.1} parent=5 // pred_check_branch
        %207 = sbr.rel (%p204) target = $region12
      $region11: #{tpu_custom_call.1} parent=5 // pred_region
        %s208 = ssub.s32 %s16, 1
        // Predicated region
        $region13: #{tpu_custom_call.1} parent=11 // pred_check
          %p209 = pneg %p63
        $region14: #{tpu_custom_call.1} parent=11 // pred_check_branch
          %211 = sbr.rel (%p209) target = $region16
        $region15: #{tpu_custom_call.1} parent=11 // pred_region
          _
        $region16: #{tpu_custom_call.1} parent=11 // pred_fallthru
          _
        // Predicated region
        $region17: #{tpu_custom_call.1} parent=11 // pred_check
          %p212 = pneg %p84
        $region18: #{tpu_custom_call.1} parent=11 // pred_check_branch
          %214 = sbr.rel (%p212) target = $region20
        $region19: #{tpu_custom_call.1} parent=11 // pred_region
          _
        $region20: #{tpu_custom_call.1} parent=11 // pred_fallthru
          _
        // Predicated region
        $region21: #{tpu_custom_call.1} parent=11 // pred_check
          %p215 = pneg %p105
        $region22: #{tpu_custom_call.1} parent=11 // pred_check_branch
          %217 = sbr.rel (%p215) target = $region24
        $region23: #{tpu_custom_call.1} parent=11 // pred_region
          _
        $region24: #{tpu_custom_call.1} parent=11 // pred_fallthru
          _
        // Predicated region
        $region25: #{tpu_custom_call.1} parent=11 // pred_check
          %p218 = pneg %p126
        $region26: #{tpu_custom_call.1} parent=11 // pred_check_branch
          %220 = sbr.rel (%p218) target = $region28
        $region27: #{tpu_custom_call.1} parent=11 // pred_region
          _
        $region28: #{tpu_custom_call.1} parent=11 // pred_fallthru
          _
        // Predicated region
        $region29: #{tpu_custom_call.1} parent=11 // pred_check
          %p221 = pneg %p147
        $region30: #{tpu_custom_call.1} parent=11 // pred_check_branch
          %223 = sbr.rel (%p221) target = $region32
        $region31: #{tpu_custom_call.1} parent=11 // pred_region
          _
        $region32: #{tpu_custom_call.1} parent=11 // pred_fallthru
          _
        // Predicated region
        $region33: #{tpu_custom_call.1} parent=11 // pred_check
          %p224 = pneg %p168
        $region34: #{tpu_custom_call.1} parent=11 // pred_check_branch
          %226 = sbr.rel (%p224) target = $region36
        $region35: #{tpu_custom_call.1} parent=11 // pred_region
          _
        $region36: #{tpu_custom_call.1} parent=11 // pred_fallthru
          _
      $region12: #{tpu_custom_call.1} parent=5 // pred_fallthru
        _
      %p227 = scmp.lt.s32.totalorder %s16, 3
      // Predicated region
      $region37: #{tpu_custom_call.1} parent=5 // pred_check
        %p228 = pneg %p227
      $region38: #{tpu_custom_call.1} parent=5 // pred_check_branch
        %230 = sbr.rel (%p228) target = $region40
      $region39: #{tpu_custom_call.1} parent=5 // pred_region
        // Predicated region
        $region41: #{tpu_custom_call.1} parent=39 // pred_check
          %p231 = pneg %p36
        $region42: #{tpu_custom_call.1} parent=39 // pred_check_branch
          %233 = sbr.rel (%p231) target = $region44
        $region43: #{tpu_custom_call.1} parent=39 // pred_region
          %p234 = scmp.lt.s32.totalorder %s16, 2
          %s235 = scalar_select %p234, %s16, 2
          %s236 = smul.addr %s235, 8
          %s237 = scalar_lea.vmem %s0, %s236
        $region44: #{tpu_custom_call.1} parent=39 // pred_fallthru
          _
      $region40: #{tpu_custom_call.1} parent=5 // pred_fallthru
        _
      %p238 = scmp.le.s32.totalorder 1, %s16
      %p239 = scmp.lt.s32.totalorder %s16, 4
      %p240 = pnand %p238, %p239
      %p241 = pneg %p240
      // Predicated region
      $region45: #{tpu_custom_call.1} parent=5 // pred_check
        _
      $region46: #{tpu_custom_call.1} parent=5 // pred_check_branch
        %243 = sbr.rel (%p240) target = $region48
      $region47: #{tpu_custom_call.1} parent=5 // pred_region
        %s244 = ssub.s32 %s16, 1
        %p245 = scmp.lt.s32.totalorder %s21, 2
        %s246 = scalar_select %p245, %s21, 2
        %s247 = smul.addr %s246, 8
        %s248 = scalar_lea.vmem %s0, %s247
        %p249 = pneg %p42
        %p250 = pneg %p39
        %p251 = pneg %p63
        %p252 = pneg %p60
        %p253 = pneg %p84
        %p254 = pneg %p81
        %p255 = pneg %p105
        %p256 = pneg %p102
        %p257 = pneg %p126
        %p258 = pneg %p123
        %p259 = pneg %p147
        %p260 = pneg %p144
        %p261 = pneg %p168
        %p262 = pneg %p165
        %p263 = pneg %p194
        %p264 = pneg %p191
        %s265 = sand.u32 %s181, 1
        %s266 = scalar_lea.sflag [#allocation3], %s265
        %s267 = sand.u32 %s181, 1
        %s268 = smul.addr %s267, 8
        %s269 = scalar_lea.vmem [#allocation2], %s268
        %p270 = scmp.lt.s32.totalorder %s21, 2
        %s271 = scalar_select %p270, %s21, 2
        %s272 = smul.addr %s271, 8
        %s273 = scalar_lea.vmem %s0, %s272
        %v275 = vld [vmem:[%s273] sm:$0xff]
        %v276 = vpack.c.bf16 %v275, %v275
        %v277 = vld [vmem:[%s1] sm:$0xf]
        %v278 = vld [vmem:[%s1 + $0x4] sm:$0xf]
        %v279 = vld [vmem:[%s2] sm:$0x1]
        %v281 = vlaneseq
        %v282 = vshrl.u32 %v281, 7
        %v283 = vsub.s32 0, %v282
        %v284 = vrot.slane %v279, %v283
        %v288 = vunpack.c.l.b16 %v277
        %v289 = vunpack.c.l.b16 %v278
        %v290 = vpack.c.b16 %v289, %v288
        %vm292 = vcmask 130048
        %v294 = vsel %vm292, %v276, 0
        %296 = vmatprep.subr.bf16.mxu0 0
        %297 = vmatpush1.bf16.msra.mxu0 0
        %298 = vmatprep.subr.bf16.mxu0 0
        %299 = vmatpush1.bf16.msra.mxu0 0
        %300 = vmatprep.subr.bf16.mxu0 0
        %301 = vmatpush1.bf16.msra.mxu0 0
        %302 = vmatprep.subr.bf16.mxu0 0
        %303 = vmatpush1.bf16.msra.mxu0 0
        %304 = vmatprep.subr.bf16.mxu0 0
        %305 = vmatpush1.bf16.msra.mxu0 0
        %306 = vmatprep.subr.bf16.mxu0 0
        %307 = vmatpush1.bf16.msra.mxu0 0
        %308 = vmatprep.subr.bf16.mxu0 0
        %309 = vmatpush1.bf16.msra.mxu0 0
        %310 = vmatprep.subr.bf16.mxu0 0
        %311 = vmatpush1.bf16.msra.mxu0 %v290
        %312 = vmatprep.subr.bf16.mxu0 0
        %313 = vmatpush2.bf16.msra.mxu0 0
        %314 = vmatprep.subr.bf16.mxu0 0
        %315 = vmatpush2.bf16.msra.mxu0 0
        %316 = vmatprep.subr.bf16.mxu0 0
        %317 = vmatpush2.bf16.msra.mxu0 0
        %318 = vmatprep.subr.bf16.mxu0 0
        %319 = vmatpush2.bf16.msra.mxu0 0
        %320 = vmatprep.subr.bf16.mxu0 0
        %321 = vmatpush2.bf16.msra.mxu0 0
        %322 = vmatprep.subr.bf16.mxu0 0
        %323 = vmatpush2.bf16.msra.mxu0 0
        %324 = vmatprep.subr.bf16.mxu0 0
        %325 = vmatpush2.bf16.msra.mxu0 0
        %326 = vmatprep.subr.bf16.mxu0 0
        %327 = vmatpush2.bf16.msra.mxu0 0
        %328 = vmatprep.mubr.bf16.mxu0 0
        %329 = vmatmul.mubr.bf16.gmra.mxu0 %v294
        %v330 = vpop.f32.mrf.mxu0
        %v331 = vadd.f32 %v284, %v330
        %v332 = vpop.f32.mrf.mxu0
        %v333 = vpop.f32.mrf.mxu0
        %v334 = vpop.f32.mrf.mxu0
        %335 = vdwg.mxu0
        %v336 = vtanh.pop %v331
        %v337 = vpack.c.bf16 %v336, %v336
        %v338 = vld [vmem:[%s3] sm:$0xf]
        %v339 = vld [vmem:[%s3 + $0x4] sm:$0xf]
        %v340 = vld [vmem:[%s3 + $0x8] sm:$0xf]
        %v341 = vld [vmem:[%s3 + $0xc] sm:$0xf]
        %v342 = vld [vmem:[%s4] sm:$0x1]
        %v344 = vlaneseq
        %v345 = vshrl.u32 %v344, 7
        %v346 = vsub.s32 0, %v345
        %v347 = vrot.slane %v342, %v346
        %v353 = vunpack.c.l.b16 %v338
        %v354 = vunpack.c.l.b16 %v339
        %v355 = vunpack.c.l.b16 %v340
        %v356 = vunpack.c.l.b16 %v341
        %v357 = vpack.c.b16 %v354, %v353
        %v358 = vpack.c.b16 %v356, %v355
        %vm361 = vcmask 261120
        %v363 = vsel %vm361, %v337, 0
        %365 = vmatprep.subr.bf16.mxu0 0
        %366 = vmatpush1.bf16.msra.mxu0 0
        %367 = vmatprep.subr.bf16.mxu0 0
        %368 = vmatpush1.bf16.msra.mxu0 0
        %369 = vmatprep.subr.bf16.mxu0 0
        %370 = vmatpush1.bf16.msra.mxu0 0
        %371 = vmatprep.subr.bf16.mxu0 0
        %372 = vmatpush1.bf16.msra.mxu0 0
        %373 = vmatprep.subr.bf16.mxu0 0
        %374 = vmatpush1.bf16.msra.mxu0 0
        %375 = vmatprep.subr.bf16.mxu0 0
        %376 = vmatpush1.bf16.msra.mxu0 0
        %377 = vmatprep.subr.bf16.mxu0 0
        %378 = vmatpush1.bf16.msra.mxu0 %v358
        %379 = vmatprep.subr.bf16.mxu0 0
        %380 = vmatpush1.bf16.msra.mxu0 %v357
        %381 = vmatprep.subr.bf16.mxu0 0
        %382 = vmatpush2.bf16.msra.mxu0 0
        %383 = vmatprep.subr.bf16.mxu0 0
        %384 = vmatpush2.bf16.msra.mxu0 0
        %385 = vmatprep.subr.bf16.mxu0 0
        %386 = vmatpush2.bf16.msra.mxu0 0
        %387 = vmatprep.subr.bf16.mxu0 0
        %388 = vmatpush2.bf16.msra.mxu0 0
        %389 = vmatprep.subr.bf16.mxu0 0
        %390 = vmatpush2.bf16.msra.mxu0 0
        %391 = vmatprep.subr.bf16.mxu0 0
        %392 = vmatpush2.bf16.msra.mxu0 0
        %393 = vmatprep.subr.bf16.mxu0 0
        %394 = vmatpush2.bf16.msra.mxu0 0
        %395 = vmatprep.subr.bf16.mxu0 0
        %396 = vmatpush2.bf16.msra.mxu0 0
        %397 = vmatprep.mubr.bf16.mxu0 0
        %398 = vmatmul.mubr.bf16.gmra.mxu0 %v363
        %v399 = vpop.f32.mrf.mxu0
        %v400 = vadd.f32 %v347, %v399
        %v401 = vpop.f32.mrf.mxu0
        %v402 = vpop.f32.mrf.mxu0
        %v403 = vpop.f32.mrf.mxu0
        %404 = vdwg.mxu0
        %v405 = vtanh.pop %v400
        %v406 = vpack.c.bf16 %v405, %v405
        %v407 = vld [vmem:[%s5] sm:$0xf]
        %v408 = vld [vmem:[%s5 + $0x4] sm:$0xf]
        %v409 = vld [vmem:[%s5 + $0x8] sm:$0xf]
        %v410 = vld [vmem:[%s5 + $0xc] sm:$0xf]
        %v411 = vld [vmem:[%s6] sm:$0x1]
        %v413 = vlaneseq
        %v414 = vshrl.u32 %v413, 7
        %v415 = vsub.s32 0, %v414
        %v416 = vrot.slane %v411, %v415
        %v422 = vunpack.c.l.b16 %v407
        %v423 = vunpack.c.l.b16 %v408
        %v424 = vunpack.c.l.b16 %v409
        %v425 = vunpack.c.l.b16 %v410
        %v426 = vpack.c.b16 %v423, %v422
        %v427 = vpack.c.b16 %v425, %v424
        %v431 = vsel %vm361, %v406, 0
        %433 = vmatprep.subr.bf16.mxu0 0
        %434 = vmatpush1.bf16.msra.mxu0 0
        %435 = vmatprep.subr.bf16.mxu0 0
        %436 = vmatpush1.bf16.msra.mxu0 0
        %437 = vmatprep.subr.bf16.mxu0 0
        %438 = vmatpush1.bf16.msra.mxu0 0
        %439 = vmatprep.subr.bf16.mxu0 0
        %440 = vmatpush1.bf16.msra.mxu0 0
        %441 = vmatprep.subr.bf16.mxu0 0
        %442 = vmatpush1.bf16.msra.mxu0 0
        %443 = vmatprep.subr.bf16.mxu0 0
        %444 = vmatpush1.bf16.msra.mxu0 0
        %445 = vmatprep.subr.bf16.mxu0 0
        %446 = vmatpush1.bf16.msra.mxu0 %v427
        %447 = vmatprep.subr.bf16.mxu0 0
        %448 = vmatpush1.bf16.msra.mxu0 %v426
        %449 = vmatprep.subr.bf16.mxu0 0
        %450 = vmatpush2.bf16.msra.mxu0 0
        %451 = vmatprep.subr.bf16.mxu0 0
        %452 = vmatpush2.bf16.msra.mxu0 0
        %453 = vmatprep.subr.bf16.mxu0 0
        %454 = vmatpush2.bf16.msra.mxu0 0
        %455 = vmatprep.subr.bf16.mxu0 0
        %456 = vmatpush2.bf16.msra.mxu0 0
        %457 = vmatprep.subr.bf16.mxu0 0
        %458 = vmatpush2.bf16.msra.mxu0 0
        %459 = vmatprep.subr.bf16.mxu0 0
        %460 = vmatpush2.bf16.msra.mxu0 0
        %461 = vmatprep.subr.bf16.mxu0 0
        %462 = vmatpush2.bf16.msra.mxu0 0
        %463 = vmatprep.subr.bf16.mxu0 0
        %464 = vmatpush2.bf16.msra.mxu0 0
        %465 = vmatprep.mubr.bf16.mxu0 0
        %466 = vmatmul.mubr.bf16.gmra.mxu0 %v431
        %v467 = vpop.f32.mrf.mxu0
        %v468 = vadd.f32 %v416, %v467
        %v469 = vpop.f32.mrf.mxu0
        %v470 = vpop.f32.mrf.mxu0
        %v471 = vpop.f32.mrf.mxu0
        %472 = vdwg.mxu0
        %473 = vst [vmem:[%s269] sm:$0xff] %v468
        %s474 = sand.u32 %s181, 1
        %s475 = scalar_lea.sflag [#allocation3], %s474
        %s476 = sand.u32 %s181, 1
        %s477 = smul.addr %s476, 8
        %s478 = scalar_lea.vmem [#allocation2], %s477
        // Predicated region
        $region49: #{tpu_custom_call.1} parent=47 // pred_check
          %p479 = pneg %p191
        $region50: #{tpu_custom_call.1} parent=47 // pred_check_branch
          %481 = sbr.rel (%p479) target = $region52
        $region51: #{tpu_custom_call.1} parent=47 // pred_region
          %s483 = ssub.s32 128, 128
          %484 = vsyncadd %s475, %s483
          %s485 = smul.addr %s21, 128
          %s486 = scalar_lea.hbm %s7, %s485
          %s488 = sshll.u32 %s478, 4
          %s489 = int_to_ptr.vmem [resolvable:$true] %s488
          %491 = dma.vmem_to_hbm [thread:$0]  %s489, 128, %s486, %s475
        $region52: #{tpu_custom_call.1} parent=47 // pred_fallthru
          _
      $region48: #{tpu_custom_call.1} parent=5 // pred_fallthru
        _
      %p492 = scmp.le.s32.totalorder 2, %s16
      // Predicated region
      $region53: #{tpu_custom_call.1} parent=5 // pred_check
        %p493 = pneg %p492
      $region54: #{tpu_custom_call.1} parent=5 // pred_check_branch
        %495 = sbr.rel (%p493) target = $region56
      $region55: #{tpu_custom_call.1} parent=5 // pred_region
        %s496 = ssub.s32 %s16, 2
        // Predicated region
        $region57: #{tpu_custom_call.1} parent=55 // pred_check
          %p497 = pneg %p197
        $region58: #{tpu_custom_call.1} parent=55 // pred_check_branch
          %499 = sbr.rel (%p497) target = $region60
        $region59: #{tpu_custom_call.1} parent=55 // pred_region
          %s500 = sand.u32 %s182, 1
          %s501 = scalar_lea.sflag [#allocation3], %s500
          %s502 = sand.u32 %s182, 1
          %s503 = smul.addr %s502, 8
          %s504 = scalar_lea.vmem [#allocation2], %s503
          %505 = dma.done %s501, 128
        $region60: #{tpu_custom_call.1} parent=55 // pred_fallthru
          _
      $region56: #{tpu_custom_call.1} parent=5 // pred_fallthru
        _
    $region6: #{tpu_custom_call.1} parent=1 // loop_footer
      %s20 = sadd.s32 1, %s16
    $region7: #{tpu_custom_call.1} parent=1 // loop_footer_branch
      %15 = sbr.rel target = $region3
    $region8: #{tpu_custom_call.1} parent=1 // loop_exit
      _
    %506 = vsyncpa [#allocation3], 1
    %s507 = scalar_lea.sflag [#allocation3], 1
    %508 = vsyncpa %s507, 1

</llo_original>
